<compile_context>
chip_gen: v7x
topology: tpu7x:2x2x1
jax: 0.10.0
libtpu: 0.0.40
codegen_flags: <defaults>
</compile_context>

<pallas_src>
import functools

import numpy as np
import jax
import jax.numpy as jnp
from jax.experimental import pallas as pl
from jax.experimental.pallas import tpu as pltpu


# --------------------------------------------------------------------------
# Small helpers
# --------------------------------------------------------------------------
def _round_up(x, m):
    return ((x + m - 1) // m) * m


def _round_down(x, m):
    return (x // m) * m


def _vmem_budgets():
    """(vmem_limit_bytes, tile_budget_bytes, tm_cap) for this TPU generation."""
    try:
        vmem_cap = pltpu.get_tpu_info().vmem_capacity_bytes
    except Exception:
        vmem_cap = 64 * 1024 * 1024  # unknown -> conservative (v7x-like)
    if vmem_cap >= 100 * 1024 * 1024:       # v5e / v6e: 128 MiB physical VMEM
        return 64 * 1024 * 1024, 48 * 1024 * 1024, 1024
    else:                                    # v7x: 64 MiB per TensorCore
        return 32 * 1024 * 1024, 24 * 1024 * 1024, 512


# --------------------------------------------------------------------------
# pipeline_mode=pl.Buffered(1) support probe (single-buffer resident operands)
# --------------------------------------------------------------------------
_BUFFERED_SUPPORT = None


def _probe_buffered_support():
    try:
        spec = pl.BlockSpec((8, 128), lambda i: (0, 0),
                            pipeline_mode=pl.Buffered(1))

        def _k(x_ref, o_ref):
            o_ref[...] = x_ref[...] + 1.0

        fn = pl.pallas_call(
            _k,
            out_shape=jax.ShapeDtypeStruct((8, 128), jnp.float32),
            grid=(1,),
            in_specs=[spec],
            out_specs=pl.BlockSpec((8, 128), lambda i: (0, 0)),
        )
        jax.jit(fn).lower(jax.ShapeDtypeStruct((8, 128), jnp.float32)).compile()
        return True
    except Exception:
        return False


def _buffered_supported():
    global _BUFFERED_SUPPORT
    if _BUFFERED_SUPPORT is None:
        _BUFFERED_SUPPORT = _probe_buffered_support()
    return _BUFFERED_SUPPORT


def _resident_spec(shape, index_map):
    """BlockSpec for an operand whose window never changes across the grid:
    single-buffer it when supported (saves one full copy of the weight in
    VMEM), otherwise fall back to the default double-buffered spec."""
    if _buffered_supported():
        return pl.BlockSpec(shape, index_map, pipeline_mode=pl.Buffered(1))
    return pl.BlockSpec(shape, index_map)


# --------------------------------------------------------------------------
# Kernels
# --------------------------------------------------------------------------
def _gating_kernel(z_ref, wt_ref, b_ref, out_ref):
    # z_ref : (TM, D)      streamed activation tile (double-buffered)
    # wt_ref: (D, E_pad)   weight, VMEM-resident (single-buffered if possible)
    # b_ref : (1, E_pad)   f32 bias, VMEM-resident
    # out_ref: (TM, E_pad) lane-dense logits tile
    acc = jnp.dot(z_ref[...], wt_ref[...], preferred_element_type=jnp.float32)
    out_ref[...] = (acc + b_ref[...]).astype(out_ref.dtype)


def _gating_kernel_ktiled(z_ref, wt_ref, b_ref, out_ref, acc_ref):
    # K-tiled variant: grid = (batch tiles, K tiles), reduction axis last.
    k = pl.program_id(1)

    @pl.when(k == 0)
    def _():
        acc_ref[...] = jnp.zeros_like(acc_ref)

    acc_ref[...] += jnp.dot(z_ref[...], wt_ref[...],
                            preferred_element_type=jnp.float32)

    @pl.when(k == pl.num_programs(1) - 1)
    def _():
        out_ref[...] = (acc_ref[...] + b_ref[...]).astype(out_ref.dtype)


# --------------------------------------------------------------------------
# Parameter prep (done ONCE, not per forward call)
# --------------------------------------------------------------------------
def prepare_gating_params(weight, bias, weight_dtype=None):
    """weight: (E, D) PyTorch nn.Linear layout; bias: (E,).

    Returns (wt_padded, bias_padded, num_experts):
      wt_padded:   (D, E_pad)  pre-transposed, expert axis zero-padded to 128x
                   (optionally cast to weight_dtype, e.g. bf16, to halve HBM
                   bytes on this memory-bound kernel; MXU still accumulates f32)
      bias_padded: (1, E_pad)  float32
    Padded expert columns produce exact-zero logits; gating_network slices them
    off before returning.
    """
    E, D = weight.shape
    E_pad = _round_up(E, 128)
    wt = weight.T                                   # single transpose at load time
    if weight_dtype is not None:
        wt = wt.astype(weight_dtype)
    wt = jnp.pad(wt, ((0, 0), (0, E_pad - E)))
    b2 = jnp.pad(bias.astype(jnp.float32), (0, E_pad - E)).reshape(1, E_pad)
    return wt, b2, E


# --------------------------------------------------------------------------
# Tile selection
# --------------------------------------------------------------------------
def _choose_tm(batch, d, e_pad, z_isize, w_isize, out_isize,
               tile_budget_bytes, tm_cap, weight_buffers):
    """Largest batch tile (multiple of 8) whose working set fits the budget.
    Returns None when the resident weight itself doesn't fit -> caller must
    use the K-tiled path."""
    resident = weight_buffers * (d * e_pad * w_isize + e_pad * 4)
    per_row = 2 * (d * z_isize + e_pad * out_isize)   # double-buffered z + out
    avail = tile_budget_bytes - resident
    if avail < 8 * per_row:
        return None

    tm_mem = _round_down(avail // per_row, 8)

    # >=2 grid steps when the batch can be split (both v7x TCs get work).
    if batch >= 16:
        tm_split = _round_up(max(batch // 2, 8), 8)
    else:
        tm_split = _round_up(batch, 8)

    tm = min(tm_cap, tm_mem, tm_split, _round_up(batch, 8))
    tm = max(8, _round_down(tm, 8))

    # Cap batch-padding waste: dead rows are fully materialized HBM reads and
    # writes in a memory-bound kernel.
    def _pad_frac(t):
        bp = _round_up(batch, t)
        return (bp - batch) / bp

    while tm > 8 and _pad_frac(tm) > 0.125:
        tm = max(8, _round_down(tm // 2, 8))
    return tm


# --------------------------------------------------------------------------
# K-tiled escape hatch (huge latent_dim, esp. on v7x's 64 MiB per-TC VMEM)
# --------------------------------------------------------------------------
def _gating_pallas_ktiled(z, wt_padded, bias_padded, num_experts, out_dtype,
                          vmem_limit, tile_budget, tk_override=None):
    B, D = z.shape
    E_pad = wt_padded.shape[1]
    z_isize = z.dtype.itemsize
    w_isize = wt_padded.dtype.itemsize
    out_isize = np.dtype(out_dtype).itemsize

    # Modest batch tile, >=2 steps when possible.
    TM = min(256, _round_up(max(B // 2, 8), 8) if B >= 16 else _round_up(B, 8))
    TM = max(8, _round_down(TM, 8))

    if tk_override is not None:
        TK = tk_override
    else:
        resident = TM * E_pad * 4 + 2 * TM * E_pad * out_isize + 2 * E_pad * 4
        per_k = 2 * (TM * z_isize + E_pad * w_isize)
        TK = max(128, _round_down(max(tile_budget - resident, 0) // per_k, 128))

    B_pad = _round_up(B, TM)
    D_pad = _round_up(D, TK)
    z_p = jnp.pad(z, ((0, B_pad - B), (0, D_pad - D)))
    # TODO(synk): fold the D padding into prepare_gating_params when this path
    # is the common case (padding a huge weight per call is wasteful).
    wt_p = jnp.pad(wt_padded, ((0, D_pad - D), (0, 0)))

    grid = (B_pad // TM, D_pad // TK)
    cost = pl.CostEstimate(
        flops=2 * B_pad * D_pad * E_pad,
        transcendentals=0,
        bytes_accessed=(B_pad * D_pad * z_isize + D_pad * E_pad * w_isize
                        + B_pad * E_pad * out_isize),
    )

    out_padded = pl.pallas_call(
        _gating_kernel_ktiled,
        out_shape=jax.ShapeDtypeStruct((B_pad, E_pad), out_dtype),
        grid_spec=pltpu.PrefetchScalarGridSpec(
            num_scalar_prefetch=0,
            grid=grid,
            in_specs=[
                pl.BlockSpec((TM, TK), lambda i, k: (i, k)),
                pl.BlockSpec((TK, E_pad), lambda i, k: (k, 0)),
                _resident_spec((1, E_pad), lambda i, k: (0, 0)),
            ],
            out_specs=pl.BlockSpec((TM, E_pad), lambda i, k: (i, 0)),
            scratch_shapes=[pltpu.VMEM((TM, E_pad), jnp.float32)],
        ),
        compiler_params=pltpu.CompilerParams(
            dimension_semantics=("parallel", "arbitrary"),
            vmem_limit_bytes=vmem_limit,
        ),
        cost_estimate=cost,
    )(z_p, wt_p, bias_padded)

    return out_padded[:B, :num_experts]


# --------------------------------------------------------------------------
# Forward wrapper
# --------------------------------------------------------------------------
def gating_network(z, wt_padded, bias_padded, num_experts, *,
                   out_dtype=jnp.float32, force_pallas=False,
                   _force_ktile_tk=None):
    """z: (B, D); wt_padded: (D, E_pad); bias_padded: (1, E_pad) f32.
    Returns float32 logits (B, num_experts) so downstream top-k routing keeps
    full precision even for bf16 activations/weights."""
    B, D = z.shape
    E_pad = wt_padded.shape[1]

    # Tiny problems are pure pallas_call launch / per-step overhead; let XLA's
    # fused matmul handle them (the tests force the Pallas path explicitly).
    if not force_pallas and _force_ktile_tk is None \
            and 2 * B * D * num_experts < (1 << 17):
        logits = jnp.dot(z.astype(jnp.float32),
                         wt_padded[:, :num_experts].astype(jnp.float32))
        return (logits + bias_padded[0, :num_experts]).astype(out_dtype)

    vmem_limit, tile_budget, tm_cap = _vmem_budgets()
    z_isize = z.dtype.itemsize
    w_isize = wt_padded.dtype.itemsize
    out_isize = np.dtype(out_dtype).itemsize
    weight_buffers = 1 if _buffered_supported() else 2

    TM = None
    if _force_ktile_tk is None:
        TM = _choose_tm(B, D, E_pad, z_isize, w_isize, out_isize,
                        tile_budget, tm_cap, weight_buffers)
    if TM is None:
        # Resident weight doesn't fit VMEM next to the streaming tiles: tile
        # the reduction (D) axis instead of letting the kernel blow vmem_limit.
        return _gating_pallas_ktiled(z, wt_padded, bias_padded, num_experts,
                                     out_dtype, vmem_limit, tile_budget,
                                     tk_override=_force_ktile_tk)

    B_pad = _round_up(B, TM)
    z_p = jnp.pad(z, ((0, B_pad - B), (0, 0))) if B_pad != B else z

    grid = (B_pad // TM,)
    cost = pl.CostEstimate(
        flops=2 * B_pad * D * E_pad,
        transcendentals=0,
        bytes_accessed=(B_pad * D * z_isize + D * E_pad * w_isize
                        + B_pad * E_pad * out_isize),
    )

    out_padded = pl.pallas_call(
        _gating_kernel,
        out_shape=jax.ShapeDtypeStruct((B_pad, E_pad), out_dtype),
        grid_spec=pltpu.PrefetchScalarGridSpec(
            num_scalar_prefetch=0,
            grid=grid,
            in_specs=[
                # Streamed activation tiles (double-buffered by the pipeline).
                pl.BlockSpec((TM, D), lambda i: (i, 0)),
                # Weight + bias stay resident; single-buffered when supported.
                _resident_spec((D, E_pad), lambda i: (0, 0)),
                _resident_spec((1, E_pad), lambda i: (0, 0)),
            ],
            out_specs=pl.BlockSpec((TM, E_pad), lambda i: (i, 0)),
        ),
        compiler_params=pltpu.CompilerParams(
            dimension_semantics=("parallel",),
            vmem_limit_bytes=vmem_limit,
        ),
        cost_estimate=cost,
    )(z_p, wt_padded, bias_padded)

    # Slice away batch + expert padding (fuses under jit). NOTE: padded expert
    # columns are exact zeros — always slice before softmax / top-k.
    return out_padded[:B, :num_experts]


# --------------------------------------------------------------------------
# Deterministic init matching nn.Linear default: U(-1/sqrt(in), 1/sqrt(in))
# --------------------------------------------------------------------------
def _init_linear_params(key, in_features, out_features, dtype=jnp.float32):
    kw, kb = jax.random.split(key)
    bound = 1.0 / (in_features ** 0.5)
    weight = jax.random.uniform(kw, (out_features, in_features), dtype,
                                minval=-bound, maxval=bound)
    bias = jax.random.uniform(kb, (out_features,), dtype,
                              minval=-bound, maxval=bound)
    return weight, bias


if __name__ == "__main__":
    # Probe Buffered(1) support once, outside any jit trace.
    _buffered_supported()

    latent_dim = 32
    num_experts = 8
    batch = 8

    key = jax.random.PRNGKey(0)
    k_z, k_p, k_z2, k_p2 = jax.random.split(key, 4)

    z = jax.random.normal(k_z, (batch, latent_dim), dtype=jnp.float32)
    weight, bias = _init_linear_params(k_p, latent_dim, num_experts)
    wt_padded, bias_padded, E = prepare_gating_params(weight, bias)
    ref = z @ weight.T + bias

    # 1) Main Pallas path (forced so the kernel actually runs at these sizes).
    fwd = jax.jit(functools.partial(gating_network, num_experts=E,
                                    force_pallas=True))
    out = jax.block_until_ready(fwd(z, wt_padded, bias_padded))
    assert out.shape == (batch, num_experts)
    assert jnp.allclose(out, ref, atol=1e-5, rtol=1e-5)

    # 2) Auto path: this toy size takes the XLA fallback (launch-overhead guard).
    out_auto = jax.block_until_ready(
        jax.jit(functools.partial(gating_network, num_experts=E))(
            z, wt_padded, bias_padded))
    assert jnp.allclose(out_auto, ref, atol=1e-5, rtol=1e-5)

    # 3) K-tiled escape-hatch path (forced with a small TK so it compiles fast).
    b2, d2, e2 = 16, 256, 8
    z2 = jax.random.normal(k_z2, (b2, d2), dtype=jnp.float32)
    w2, bias2 = _init_linear_params(k_p2, d2, e2)
    wt2, bias2p, E2 = prepare_gating_params(w2, bias2)
    out_kt = jax.block_until_ready(
        jax.jit(functools.partial(gating_network, num_experts=E2,
                                  force_pallas=True, _force_ktile_tk=128))(
            z2, wt2, bias2p))
    ref2 = z2 @ w2.T + bias2
    assert out_kt.shape == (b2, e2)
    assert jnp.allclose(out_kt, ref2, atol=1e-4, rtol=1e-4)

    print("KERNEL_OK")
</pallas_src>

<mosaic_0001>
module attributes {stable_mosaic.version = 11 : i64} {
  func.func @_gating_kernel(%arg0: i32, %arg1: memref<8x32xf32, #tpu.memory_space<vmem>>, %arg2: memref<32x128xf32, #tpu.memory_space<vmem>>, %arg3: memref<1x128xf32, #tpu.memory_space<vmem>>, %arg4: memref<8x128xf32, #tpu.memory_space<vmem>>) attributes {dimension_semantics = [#tpu.dimension_semantics<parallel>], iteration_bounds = array<i64: 1>, scalar_prefetch = 0 : i64, scratch_operands = 0 : i64, tpu.core_type = #tpu.core_type<tc>, window_params = [{transform_indices = @transform_0, window_bounds = array<i64: 8, 32>}, {pipeline_mode = #tpu.pipeline_mode<synchronous>, transform_indices = @transform_1, window_bounds = array<i64: 32, 128>}, {pipeline_mode = #tpu.pipeline_mode<synchronous>, transform_indices = @transform_2, window_bounds = array<i64: 1, 128>}, {transform_indices = @transform_3, window_bounds = array<i64: 8, 128>}]} {
    %c0 = arith.constant 0 : index
    %c0_0 = arith.constant 0 : index
    %0 = vector.load %arg1[%c0, %c0_0] : memref<8x32xf32, #tpu.memory_space<vmem>>, vector<8x32xf32>
    %c0_1 = arith.constant 0 : index
    %c0_2 = arith.constant 0 : index
    %1 = vector.load %arg2[%c0_1, %c0_2] : memref<32x128xf32, #tpu.memory_space<vmem>>, vector<32x128xf32>
    %cst = arith.constant dense<0.000000e+00> : vector<8x128xf32>
    %2 = tpu.matmul %0, %1, %cst {dimension_numbers = #tpu.dot_dimension_numbers<[1], [0], [0], [1], [0, 0, 1, 1], [], []>} : vector<8x32xf32>, vector<32x128xf32>, vector<8x128xf32> -> vector<8x128xf32>
    %c0_3 = arith.constant 0 : index
    %c0_4 = arith.constant 0 : index
    %3 = vector.load %arg3[%c0_3, %c0_4] : memref<1x128xf32, #tpu.memory_space<vmem>>, vector<1x128xf32>
    %4 = vector.broadcast %3 : vector<1x128xf32> to vector<8x128xf32>
    %5 = arith.addf %2, %4 : vector<8x128xf32>
    %c0_5 = arith.constant 0 : index
    %c0_6 = arith.constant 0 : index
    %6 = vector.load %arg4[%c0_5, %c0_6] : memref<8x128xf32, #tpu.memory_space<vmem>>, vector<8x128xf32>
    tpu.vector_store %arg4[%c0_5, %c0_6], %5 {strides = array<i32>} : memref<8x128xf32, #tpu.memory_space<vmem>>, vector<8x128xf32>,
    return
  }
  func.func @transform_0(%arg0: i32) -> (i32, i32) {
    %c0_i32 = arith.constant 0 : i32
    %c0_i32_0 = arith.constant 0 : i32
    return %arg0, %c0_i32 : i32, i32
  }
  func.func @transform_1(%arg0: i32) -> (i32, i32) {
    %c0_i32 = arith.constant 0 : i32
    %c0_i32_0 = arith.constant 0 : i32
    %c0_i32_1 = arith.constant 0 : i32
    return %c0_i32, %c0_i32_0 : i32, i32
  }
  func.func @transform_2(%arg0: i32) -> (i32, i32) {
    %c0_i32 = arith.constant 0 : i32
    %c0_i32_0 = arith.constant 0 : i32
    %c0_i32_1 = arith.constant 0 : i32
    return %c0_i32, %c0_i32_0 : i32, i32
  }
  func.func @transform_3(%arg0: i32) -> (i32, i32) {
    %c0_i32 = arith.constant 0 : i32
    %c0_i32_0 = arith.constant 0 : i32
    return %arg0, %c0_i32 : i32, i32
  }
}

</mosaic_0001>

<llo_original>
// kernel: gating_network.1
$region0: #{gating_network.1}
  #allocation0 [shape = 'u32[]', space=smem, size = 0x4, offset = 0x4, fixed_abs, tag = 'smem constant byte address 0x4 - core index']
  #allocation1 [shape = 'u32[144,128]{1,0:T(1,128)}', space=vmem, size = 0x12000, scoped, tag = 'internal scratch']
  %s0 = inlined_call_operand.hbm [shape: f32[8,32], index: 0, kind: input, shape index: {}]
  %s1 = inlined_call_operand.hbm [shape: f32[32,128], index: 1, kind: input, shape index: {}]
  %s2 = inlined_call_operand.vmem [shape: f32[1,128], index: 2, kind: input, shape index: {}]
  %s3 = inlined_call_operand.hbm [shape: f32[8,128], index: 3, kind: output, shape index: {}]
  %s4 = sld [smem:[#allocation0]]
  $region30: #{gating_network.1} parent=0
    _
  %s6 = ssub.s32 1, %s4
  %s7 = scalar_select 0, %s6, %s4
  $region1: #{gating_network.1} parent=0
    #allocation2 [shape = 'u8[4096]{0}', space=vmem, size = 0x1000, scoped, tag = 'input window, operand 0, single buffered']
    #allocation3 [shape = 's32[1]{0}', space=sflag, size = 0x4, scoped, tag = 'scoped memory for gating_network.1']
    #allocation4 [shape = 's32[1]{0}', space=sflag, size = 0x4, scoped, tag = 'scoped memory for gating_network.1']
    #allocation5 [shape = 'u8[16384]{0}', space=vmem, size = 0x4000, scoped, tag = 'input window, operand 1, single buffered']
    #allocation6 [shape = 's32[1]{0}', space=sflag, size = 0x4, scoped, tag = 'scoped memory for gating_network.1']
    #allocation7 [shape = 'u8[4096]{0}', space=vmem, size = 0x1000, scoped, tag = 'output window, operand 0, single buffered']
    %8 = vsyncpa [#allocation3], 0
    %9 = vsyncpa [#allocation6], 0
    %10 = vsyncpa [#allocation4], 0
    // Predicated region
    $region2: #{gating_network.1} parent=1 // pred_check
      _
    $region3: #{gating_network.1} parent=1 // pred_check_branch
      %12 = sbr.rel (0) target = $region5
    $region4: #{gating_network.1} parent=1 // pred_region
      %s14 = ssub.s32 128, 128
      %15 = vsyncadd [#allocation3], %s14
      %s17 = sshll.u32 [#allocation2], 4
      %s18 = int_to_ptr.vmem [resolvable:$true] %s17
      %20 = dma.hbm_to_vmem [thread:$0]  %s0, 128, %s18, [#allocation3]
    $region5: #{gating_network.1} parent=1 // pred_fallthru
      _
    // Predicated region
    $region6: #{gating_network.1} parent=1 // pred_check
      _
    $region7: #{gating_network.1} parent=1 // pred_check_branch
      %22 = sbr.rel (0) target = $region9
    $region8: #{gating_network.1} parent=1 // pred_region
      %s24 = ssub.s32 512, 512
      %25 = vsyncadd [#allocation6], %s24
      %s26 = sshll.u32 [#allocation5], 4
      %s27 = int_to_ptr.vmem [resolvable:$true] %s26
      %32 = dma.hbm_to_vmem [thread:$0]  %s1, 512, %s27, [#allocation6], 128, 128, 8
    $region9: #{gating_network.1} parent=1 // pred_fallthru
      _
    // Predicated region
    $region10: #{gating_network.1} parent=1 // pred_check
      _
    $region11: #{gating_network.1} parent=1 // pred_check_branch
      %34 = sbr.rel (0) target = $region13
    $region12: #{gating_network.1} parent=1 // pred_region
      _
    $region13: #{gating_network.1} parent=1 // pred_fallthru
      _
    // Predicated region
    $region14: #{gating_network.1} parent=1 // pred_check
      _
    $region15: #{gating_network.1} parent=1 // pred_check_branch
      %36 = sbr.rel (0) target = $region17
    $region16: #{gating_network.1} parent=1 // pred_region
      %37 = dma.done [#allocation3], 128
    $region17: #{gating_network.1} parent=1 // pred_fallthru
      _
    // Predicated region
    $region18: #{gating_network.1} parent=1 // pred_check
      _
    $region19: #{gating_network.1} parent=1 // pred_check_branch
      %39 = sbr.rel (0) target = $region21
    $region20: #{gating_network.1} parent=1 // pred_region
      %40 = dma.done [#allocation6], 512
    $region21: #{gating_network.1} parent=1 // pred_fallthru
      _
    %v41 = vld [vmem:[#allocation2] sm:$0xff]
    %v42 = vld [vmem:[#allocation5] sm:$0xff]
    %v43 = vld [vmem:[#allocation5 + $0x8] sm:$0xff]
    %v44 = vld [vmem:[#allocation5 + $0x10] sm:$0xff]
    %v45 = vld [vmem:[#allocation5 + $0x18] sm:$0xff]
    %v46 = vld [vmem:[%s2] sm:$0x1]
    %v48 = vlaneseq
    %v49 = vshrl.u32 %v48, 7
    %v50 = vsub.s32 0, %v49
    %v51 = vrot.slane %v46, %v50
    %vm53 = vcmask 261120
    %v55 = vsel %vm53, %v41, 0
    %57 = vmatprep.subr.mxu0 0.0
    %58 = vmatpush1.msra.mxu0 %v42
    %59 = vmatprep.subr.mxu0 0.0
    %60 = vmatpush1.msra.mxu0 %v43
    %61 = vmatprep.subr.mxu0 0.0
    %62 = vmatpush1.msra.mxu0 %v44
    %63 = vmatprep.subr.mxu0 0.0
    %64 = vmatpush1.msra.mxu0 %v45
    %65 = vmatprep.subr.mxu0 0.0
    %66 = vmatpush1.msra.mxu0 0.0
    %67 = vmatprep.subr.mxu0 0.0
    %68 = vmatpush1.msra.mxu0 0.0
    %69 = vmatprep.subr.mxu0 0.0
    %70 = vmatpush1.msra.mxu0 0.0
    %71 = vmatprep.subr.mxu0 0.0
    %72 = vmatpush1.msra.mxu0 0.0
    %73 = vmatprep.subr.mxu0 0.0
    %74 = vmatpush1.msra.mxu0 0.0
    %75 = vmatprep.subr.mxu0 0.0
    %76 = vmatpush1.msra.mxu0 0.0
    %77 = vmatprep.subr.mxu0 0.0
    %78 = vmatpush1.msra.mxu0 0.0
    %79 = vmatprep.subr.mxu0 0.0
    %80 = vmatpush1.msra.mxu0 0.0
    %81 = vmatprep.subr.mxu0 0.0
    %82 = vmatpush1.msra.mxu0 0.0
    %83 = vmatprep.subr.mxu0 0.0
    %84 = vmatpush1.msra.mxu0 0.0
    %85 = vmatprep.subr.mxu0 0.0
    %86 = vmatpush1.msra.mxu0 0.0
    %87 = vmatprep.subr.mxu0 0.0
    %88 = vmatpush1.msra.mxu0 0.0
    %89 = vmatprep.subr.mxu0 0.0
    %90 = vmatpush1.msra.mxu0 0.0
    %91 = vmatprep.subr.mxu0 0.0
    %92 = vmatpush1.msra.mxu0 0.0
    %93 = vmatprep.subr.mxu0 0.0
    %94 = vmatpush1.msra.mxu0 0.0
    %95 = vmatprep.subr.mxu0 0.0
    %96 = vmatpush1.msra.mxu0 0.0
    %97 = vmatprep.subr.mxu0 0.0
    %98 = vmatpush1.msra.mxu0 0.0
    %99 = vmatprep.subr.mxu0 0.0
    %100 = vmatpush1.msra.mxu0 0.0
    %101 = vmatprep.subr.mxu0 0.0
    %102 = vmatpush1.msra.mxu0 0.0
    %103 = vmatprep.subr.mxu0 0.0
    %104 = vmatpush1.msra.mxu0 0.0
    %105 = vmatprep.subr.mxu0 0.0
    %106 = vmatpush1.msra.mxu0 0.0
    %107 = vmatprep.subr.mxu0 0.0
    %108 = vmatpush1.msra.mxu0 0.0
    %109 = vmatprep.subr.mxu0 0.0
    %110 = vmatpush1.msra.mxu0 0.0
    %111 = vmatprep.subr.mxu0 0.0
    %112 = vmatpush1.msra.mxu0 0.0
    %113 = vmatprep.subr.mxu0 0.0
    %114 = vmatpush1.msra.mxu0 0.0
    %115 = vmatprep.subr.mxu0 0.0
    %116 = vmatpush1.msra.mxu0 0.0
    %117 = vmatprep.subr.mxu0 0.0
    %118 = vmatpush1.msra.mxu0 0.0
    %119 = vmatprep.subr.mxu0 0.0
    %120 = vmatpush1.msra.mxu0 0.0
    %121 = vmatprep.mubr.f32.mxu0 0.0
    %122 = vmatmul.mubr.f32.gmra.mrb[0].mxu0 %v55
    %v123 = vpop.f32.mrb[0].mxu0
    %v124 = vadd.f32 %v51, %v123
    %v125 = vpop.f32.mrb[0].mxu0
    %126 = vdwg.mxu0
    %127 = vst [vmem:[#allocation7] sm:$0xff] %v124
    // Predicated region
    $region22: #{gating_network.1} parent=1 // pred_check
      _
    $region23: #{gating_network.1} parent=1 // pred_check_branch
      %129 = sbr.rel (0) target = $region25
    $region24: #{gating_network.1} parent=1 // pred_region
      %s131 = ssub.s32 128, 128
      %132 = vsyncadd [#allocation4], %s131
      %s134 = sshll.u32 [#allocation7], 4
      %s135 = int_to_ptr.vmem [resolvable:$true] %s134
      %137 = dma.vmem_to_hbm [thread:$0]  %s135, 128, %s3, [#allocation4]
    $region25: #{gating_network.1} parent=1 // pred_fallthru
      _
    // Predicated region
    $region26: #{gating_network.1} parent=1 // pred_check
      _
    $region27: #{gating_network.1} parent=1 // pred_check_branch
      %139 = sbr.rel (0) target = $region29
    $region28: #{gating_network.1} parent=1 // pred_region
      %140 = dma.done [#allocation4], 128
    $region29: #{gating_network.1} parent=1 // pred_fallthru
      _
    %141 = vsyncpa [#allocation3], 1
    %142 = vsyncpa [#allocation6], 1
    %143 = vsyncpa [#allocation4], 1

</llo_original>
